<compile_context>
chip_gen: v7x
topology: tpu7x:2x2x1
jax: 0.10.0
libtpu: 0.0.40
codegen_flags: <defaults>
</compile_context>

<pallas_src>
import functools

import jax
import jax.numpy as jnp
from jax.experimental import pallas as pl
from jax.experimental.pallas import tpu as pltpu


def _channel_attention_kernel(x_ref, w1t_ref, b1_ref, w2t_ref, b2_ref,
                              out_ref, *, inv_hw):
    # x block: (Bt, C, HW), native activation dtype.
    x = x_ref[...]

    # AdaptiveMaxPool2d(1) + AdaptiveAvgPool2d(1) over the lane (HW) axis.
    # Max is exact in any dtype; mean accumulates in f32 (sum * 1/HW).
    mx = jnp.max(x, axis=-1).astype(jnp.float32)            # (Bt, C)
    sm = jnp.sum(x.astype(jnp.float32), axis=-1)            # (Bt, C)
    pooled = mx + sm * inv_hw                                # (Bt, C)

    # Shared MLP (1x1 convs) as batched matmuls over the Bt pooled rows.
    h = jnp.dot(pooled, w1t_ref[...],
                preferred_element_type=jnp.float32) + b1_ref[...]   # (Bt, C_r)
    h = jnp.maximum(h, 0.0)                                          # ReLU
    o = jnp.dot(h, w2t_ref[...],
                preferred_element_type=jnp.float32) + b2_ref[...]    # (Bt, C)
    out_ref[...] = jax.nn.sigmoid(o).astype(out_ref.dtype)           # (Bt, C)


def _pick_batch_tile(N, C, HW, itemsize, target_bytes=4 << 20):
    """Largest batch tile Bt that (a) divides N, (b) keeps the (Bt,C,HW) block
    under ~target_bytes, (c) is a multiple of 8 or equal to N (so the (Bt, C)
    output block is a legal TPU tile), preferring >= 2 grid steps (megacore)."""
    divisors = [d for d in range(1, N + 1) if N % d == 0]
    valid = [d for d in divisors if (d % 8 == 0 or d == N)]

    def blk_bytes(d):
        return d * C * HW * itemsize

    fitting = [d for d in valid if blk_bytes(d) <= target_bytes]
    if not fitting:
        fitting = [min(valid, key=blk_bytes)]
    multi_step = [d for d in fitting if N // d >= 2]
    pool = multi_step if multi_step else fitting
    return max(pool)


def channel_attention_pallas(x_nchw, w1, b1, w2, b2):
    """x_nchw: (N, C, H, W); w1: (C_r, C); b1: (C_r,); w2: (C, C_r); b2: (C,)."""
    N, C, H, W = x_nchw.shape
    C_r = w1.shape[0]
    HW = H * W

    # Keep the activation in its native dtype (bandwidth-bound op).
    x = x_nchw.reshape(N, C, HW)
    itemsize = jnp.dtype(x.dtype).itemsize

    # Pre-transposed f32 weights / row-vector biases (tiny, VMEM-resident).
    w1t = w1.T.astype(jnp.float32)            # (C, C_r)
    w2t = w2.T.astype(jnp.float32)            # (C_r, C)
    b1r = b1.reshape(1, C_r).astype(jnp.float32)
    b2r = b2.reshape(1, C).astype(jnp.float32)

    Bt = _pick_batch_tile(N, C, HW, itemsize)
    grid = (N // Bt,)

    kernel = functools.partial(_channel_attention_kernel, inv_hw=float(1.0 / HW))

    cost = pl.CostEstimate(
        flops=2 * N * C * HW + 4 * N * C * C_r,
        transcendentals=N * C,
        bytes_accessed=N * C * HW * itemsize + N * C * itemsize
        + (w1t.size + w2t.size + b1r.size + b2r.size) * 4,
    )

    out = pl.pallas_call(
        kernel,
        out_shape=jax.ShapeDtypeStruct((N, C), x.dtype),
        grid_spec=pltpu.PrefetchScalarGridSpec(
            num_scalar_prefetch=0,
            grid=grid,
            in_specs=[
                pl.BlockSpec((Bt, C, HW), lambda n: (n, 0, 0)),  # activations
                pl.BlockSpec((C, C_r), lambda n: (0, 0)),        # w1^T (full)
                pl.BlockSpec((1, C_r), lambda n: (0, 0)),        # b1 row
                pl.BlockSpec((C_r, C), lambda n: (0, 0)),        # w2^T (full)
                pl.BlockSpec((1, C), lambda n: (0, 0)),          # b2 row
            ],
            out_specs=pl.BlockSpec((Bt, C), lambda n: (n, 0)),   # lane-dense
        ),
        compiler_params=pltpu.CompilerParams(
            dimension_semantics=("parallel",),
            vmem_limit_bytes=48 << 20,   # headroom for double-buffered blocks,
        ),                               # still inside v7x's 64 MiB VMEM
        cost_estimate=cost,
    )(x, w1t, b1r, w2t, b2r)

    return out.reshape(N, C, 1, 1)


def channel_attention_ref(x_nchw, w1, b1, w2, b2):
    """Pure-JAX reference matching the PyTorch forward."""
    mx = jnp.max(x_nchw.astype(jnp.float32), axis=(2, 3))     # (N, C)
    av = jnp.mean(x_nchw.astype(jnp.float32), axis=(2, 3))    # (N, C)
    p = mx + av
    h = jnp.maximum(p @ w1.T.astype(jnp.float32) + b1.astype(jnp.float32), 0.0)
    o = jax.nn.sigmoid(h @ w2.T.astype(jnp.float32) + b2.astype(jnp.float32))
    return o.astype(x_nchw.dtype).reshape(*o.shape, 1, 1)


if __name__ == "__main__":
    # Small shapes consistent with the module: C=16, H=W=16, ratio=4.
    # N=16 so the batch-tiling path (Bt=8, grid=2) is exercised.
    N, C, H, W = 16, 16, 16, 16
    ratio = 4
    C_r = C // ratio

    key = jax.random.PRNGKey(0)
    k_x, k_w1, k_b1, k_w2, k_b2 = jax.random.split(key, 5)

    x = jax.random.normal(k_x, (N, C, H, W), dtype=jnp.float32)
    # Conv2d 1x1 weights squeezed to 2D.
    w1 = jax.random.normal(k_w1, (C_r, C), dtype=jnp.float32) * (1.0 / jnp.sqrt(C))
    b1 = jax.random.normal(k_b1, (C_r,), dtype=jnp.float32) * 0.1
    w2 = jax.random.normal(k_w2, (C, C_r), dtype=jnp.float32) * (1.0 / jnp.sqrt(C_r))
    b2 = jax.random.normal(k_b2, (C,), dtype=jnp.float32) * 0.1

    out = channel_attention_pallas(x, w1, b1, w2, b2)
    out = jax.block_until_ready(out)

    ref = channel_attention_ref(x, w1, b1, w2, b2)
    assert out.shape == (N, C, 1, 1), out.shape
    assert jnp.allclose(out, ref, atol=1e-5, rtol=1e-5), "mismatch vs reference"

    print("KERNEL_OK")
</pallas_src>

<mosaic_0001>
module attributes {stable_mosaic.version = 11 : i64} {
  func.func @_channel_attention_kernel(%arg0: i32, %arg1: memref<8x16x256xf32, #tpu.memory_space<vmem>>, %arg2: memref<16x4xf32, #tpu.memory_space<vmem>>, %arg3: memref<1x4xf32, #tpu.memory_space<vmem>>, %arg4: memref<4x16xf32, #tpu.memory_space<vmem>>, %arg5: memref<1x16xf32, #tpu.memory_space<vmem>>, %arg6: memref<8x16xf32, #tpu.memory_space<vmem>>) attributes {dimension_semantics = [#tpu.dimension_semantics<parallel>], iteration_bounds = array<i64: 2>, scalar_prefetch = 0 : i64, scratch_operands = 0 : i64, tpu.core_type = #tpu.core_type<tc>, window_params = [{transform_indices = @transform_0, window_bounds = array<i64: 8, 16, 256>}, {pipeline_mode = #tpu.pipeline_mode<synchronous>, transform_indices = @transform_1, window_bounds = array<i64: 16, 4>}, {pipeline_mode = #tpu.pipeline_mode<synchronous>, transform_indices = @transform_2, window_bounds = array<i64: 1, 4>}, {pipeline_mode = #tpu.pipeline_mode<synchronous>, transform_indices = @transform_3, window_bounds = array<i64: 4, 16>}, {pipeline_mode = #tpu.pipeline_mode<synchronous>, transform_indices = @transform_4, window_bounds = array<i64: 1, 16>}, {transform_indices = @transform_5, window_bounds = array<i64: 8, 16>}]} {
    %c0 = arith.constant 0 : index
    %c0_0 = arith.constant 0 : index
    %c0_1 = arith.constant 0 : index
    %0 = vector.load %arg1[%c0, %c0_0, %c0_1] : memref<8x16x256xf32, #tpu.memory_space<vmem>>, vector<8x16x256xf32>
    %cst = arith.constant dense<0xFF800000> : vector<8x16xf32>
    %1 = vector.multi_reduction <maximumf>, %0, %cst [2] : vector<8x16x256xf32> to vector<8x16xf32>
    %cst_2 = arith.constant dense<0.000000e+00> : vector<8x16xf32>
    %2 = vector.multi_reduction <add>, %0, %cst_2 [2] : vector<8x16x256xf32> to vector<8x16xf32>
    %cst_3 = arith.constant 3.906250e-03 : f32
    %3 = vector.broadcast %cst_3 : f32 to vector<8x16xf32>
    %4 = arith.mulf %2, %3 : vector<8x16xf32>
    %5 = arith.addf %1, %4 : vector<8x16xf32>
    %c0_4 = arith.constant 0 : index
    %c0_5 = arith.constant 0 : index
    %6 = vector.load %arg2[%c0_4, %c0_5] : memref<16x4xf32, #tpu.memory_space<vmem>>, vector<16x4xf32>
    %cst_6 = arith.constant dense<0.000000e+00> : vector<8x4xf32>
    %7 = tpu.matmul %5, %6, %cst_6 {dimension_numbers = #tpu.dot_dimension_numbers<[1], [0], [0], [1], [0, 0, 1, 1], [], []>} : vector<8x16xf32>, vector<16x4xf32>, vector<8x4xf32> -> vector<8x4xf32>
    %c0_7 = arith.constant 0 : index
    %c0_8 = arith.constant 0 : index
    %8 = vector.load %arg3[%c0_7, %c0_8] : memref<1x4xf32, #tpu.memory_space<vmem>>, vector<1x4xf32>
    %9 = vector.broadcast %8 : vector<1x4xf32> to vector<8x4xf32>
    %10 = arith.addf %7, %9 : vector<8x4xf32>
    %cst_9 = arith.constant 0.000000e+00 : f32
    %11 = vector.broadcast %cst_9 : f32 to vector<8x4xf32>
    %12 = arith.maximumf %10, %11 : vector<8x4xf32>
    %c0_10 = arith.constant 0 : index
    %c0_11 = arith.constant 0 : index
    %13 = vector.load %arg4[%c0_10, %c0_11] : memref<4x16xf32, #tpu.memory_space<vmem>>, vector<4x16xf32>
    %cst_12 = arith.constant dense<0.000000e+00> : vector<8x16xf32>
    %14 = tpu.matmul %12, %13, %cst_12 {dimension_numbers = #tpu.dot_dimension_numbers<[1], [0], [0], [1], [0, 0, 1, 1], [], []>} : vector<8x4xf32>, vector<4x16xf32>, vector<8x16xf32> -> vector<8x16xf32>
    %c0_13 = arith.constant 0 : index
    %c0_14 = arith.constant 0 : index
    %15 = vector.load %arg5[%c0_13, %c0_14] : memref<1x16xf32, #tpu.memory_space<vmem>>, vector<1x16xf32>
    %16 = vector.broadcast %15 : vector<1x16xf32> to vector<8x16xf32>
    %17 = arith.addf %14, %16 : vector<8x16xf32>
    %18 = arith.negf %17 : vector<8x16xf32>
    %19 = math.exp %18 : vector<8x16xf32>
    %cst_15 = arith.constant 1.000000e+00 : f32
    %20 = vector.broadcast %cst_15 : f32 to vector<8x16xf32>
    %21 = arith.addf %20, %19 : vector<8x16xf32>
    %22 = arith.divf %20, %21 : vector<8x16xf32>
    %c0_16 = arith.constant 0 : index
    %c0_17 = arith.constant 0 : index
    %23 = vector.load %arg6[%c0_16, %c0_17] : memref<8x16xf32, #tpu.memory_space<vmem>>, vector<8x16xf32>
    tpu.vector_store %arg6[%c0_16, %c0_17], %22 {strides = array<i32>} : memref<8x16xf32, #tpu.memory_space<vmem>>, vector<8x16xf32>,
    return
  }
  func.func @transform_0(%arg0: i32) -> (i32, i32, i32) {
    %c0_i32 = arith.constant 0 : i32
    %c0_i32_0 = arith.constant 0 : i32
    %c0_i32_1 = arith.constant 0 : i32
    return %arg0, %c0_i32, %c0_i32_0 : i32, i32, i32
  }
  func.func @transform_1(%arg0: i32) -> (i32, i32) {
    %c0_i32 = arith.constant 0 : i32
    %c0_i32_0 = arith.constant 0 : i32
    %c0_i32_1 = arith.constant 0 : i32
    return %c0_i32, %c0_i32_0 : i32, i32
  }
  func.func @transform_2(%arg0: i32) -> (i32, i32) {
    %c0_i32 = arith.constant 0 : i32
    %c0_i32_0 = arith.constant 0 : i32
    %c0_i32_1 = arith.constant 0 : i32
    return %c0_i32, %c0_i32_0 : i32, i32
  }
  func.func @transform_3(%arg0: i32) -> (i32, i32) {
    %c0_i32 = arith.constant 0 : i32
    %c0_i32_0 = arith.constant 0 : i32
    %c0_i32_1 = arith.constant 0 : i32
    return %c0_i32, %c0_i32_0 : i32, i32
  }
  func.func @transform_4(%arg0: i32) -> (i32, i32) {
    %c0_i32 = arith.constant 0 : i32
    %c0_i32_0 = arith.constant 0 : i32
    %c0_i32_1 = arith.constant 0 : i32
    return %c0_i32, %c0_i32_0 : i32, i32
  }
  func.func @transform_5(%arg0: i32) -> (i32, i32) {
    %c0_i32 = arith.constant 0 : i32
    %c0_i32_0 = arith.constant 0 : i32
    return %arg0, %c0_i32 : i32, i32
  }
}

</mosaic_0001>

<llo_original>
// kernel: tpu_custom_call.1
$region0: #{tpu_custom_call.1}
  #allocation0 [shape = 'u32[]', space=smem, size = 0x4, offset = 0x4, fixed_abs, tag = 'smem constant byte address 0x4 - core index']
  #allocation1 [shape = 'u32[144,128]{1,0:T(1,128)}', space=vmem, size = 0x12000, scoped, tag = 'internal scratch']
  %s0 = inlined_call_operand.hbm [shape: f32[16,16,256], index: 0, kind: input, shape index: {}]
  %s1 = inlined_call_operand.vmem [shape: f32[16,4], index: 1, kind: input, shape index: {}]
  %s2 = inlined_call_operand.vmem [shape: f32[1,4], index: 2, kind: input, shape index: {}]
  %s3 = inlined_call_operand.vmem [shape: f32[4,16], index: 3, kind: input, shape index: {}]
  %s4 = inlined_call_operand.vmem [shape: f32[1,16], index: 4, kind: input, shape index: {}]
  %s5 = inlined_call_operand.hbm [shape: f32[16,16], index: 5, kind: output, shape index: {}]
  %s6 = sld [smem:[#allocation0]]
  $region57: #{tpu_custom_call.1} parent=0
    _
  %s8 = ssub.s32 1, %s6
  %s9 = scalar_select 0, %s8, %s6
  $region1: #{tpu_custom_call.1} parent=0
    #allocation2 [shape = 'u8[262144]{0}', space=vmem, size = 0x40000, scoped, tag = 'input window, operand 0']
    #allocation3 [shape = 's32[2]{0}', space=sflag, size = 0x8, scoped, tag = 'scoped memory for tpu_custom_call.1']
    #allocation4 [shape = 's32[2]{0}', space=sflag, size = 0x8, scoped, tag = 'scoped memory for tpu_custom_call.1']
    #allocation5 [shape = 'u8[8192]{0}', space=vmem, size = 0x2000, scoped, tag = 'output window, operand 0']
    %10 = vsyncpa [#allocation3], 0
    %s11 = scalar_lea.sflag [#allocation3], 1
    %12 = vsyncpa %s11, 0
    %13 = vsyncpa [#allocation4], 0
    %s14 = scalar_lea.sflag [#allocation4], 1
    %15 = vsyncpa %s14, 0
    loop: start=0, step=1, limit=4
    $region2: #{tpu_custom_call.1} parent=1 // loop_pre_header
      _
    $region3: #{tpu_custom_call.1} parent=1 // loop_header
      %s17 = sphi 0, %s21
      %p18 = scmp.ge.s32.totalorder %s17, 4
      %s27 = sphi 0, %s29
      %s30 = sphi 0, %s27
      %s31 = sphi 0, %s30
      %s47 = sphi 0, %s31
      %s51 = sphi 0, %s51
      %s53 = sphi 0, %s51
      %s54 = sphi 0, %s53
      %s68 = sphi 0, %s54
      %s72 = sphi 0, %s72
      %s74 = sphi 0, %s72
      %s75 = sphi 0, %s74
      %s89 = sphi 0, %s75
      %s93 = sphi 0, %s93
      %s95 = sphi 0, %s93
      %s96 = sphi 0, %s95
      %s110 = sphi 0, %s96
      %s114 = sphi 0, %s114
      %s116 = sphi 0, %s114
      %s117 = sphi 0, %s116
      %s131 = sphi 0, %s117
      %s137 = sphi 0, %s139
      %s140 = sphi 0, %s137
      %s141 = sphi 0, %s140
      %s157 = sphi 0, %s141
    $region4: #{tpu_custom_call.1} parent=1 // loop_header_branch
      %20 = sbr.rel (%p18) target = $region8
    $region5: #{tpu_custom_call.1} parent=1 // loop_body
      %s22 = ssub.s32 %s17, 1
      %s23 = ssub.s32 %s17, 2
      %s24 = sadd.s32 %s17, 1
      %s25 = ssub.s32 %s17, %s24
      %p26 = scmp.eq.s32.totalorder %s25, 0
      %s28 = sadd.s32 %s27, 1
      %s29 = scalar_select %p26, %s27, %s28
      %p32 = pneg %p26
      %p33 = scmp.eq.s32.totalorder %s17, 1
      %p34 = por %p32, %p33
      %p35 = scmp.ne.s32.totalorder %s27, %s30
      %p36 = scmp.eq.s32.totalorder %s17, 0
      %p37 = por %p35, %p36
      %p38 = scmp.ne.s32.totalorder %s27, %s30
      %p39 = scmp.eq.s32.totalorder %s22, 1
      %p40 = por %p38, %p39
      %p41 = scmp.ne.s32.totalorder %s30, %s31
      %p42 = scmp.eq.s32.totalorder %s22, 0
      %p43 = por %p41, %p42
      %p44 = scmp.ne.s32.totalorder %s30, %s31
      %p45 = scmp.eq.s32.totalorder %s23, 1
      %p46 = por %p44, %p45
      %p48 = scmp.ne.s32.totalorder %s31, %s47
      %p49 = scmp.eq.s32.totalorder %s23, 0
      %p50 = por %p48, %p49
      %s52 = sadd.s32 %s51, 1
      %p55 = scmp.eq.s32.totalorder %s17, 1
      %p56 = scmp.ne.s32.totalorder %s51, %s53
      %p57 = scmp.eq.s32.totalorder %s17, 0
      %p58 = por %p56, %p57
      %p59 = scmp.ne.s32.totalorder %s51, %s53
      %p60 = scmp.eq.s32.totalorder %s22, 1
      %p61 = por %p59, %p60
      %p62 = scmp.ne.s32.totalorder %s53, %s54
      %p63 = scmp.eq.s32.totalorder %s22, 0
      %p64 = por %p62, %p63
      %p65 = scmp.ne.s32.totalorder %s53, %s54
      %p66 = scmp.eq.s32.totalorder %s23, 1
      %p67 = por %p65, %p66
      %p69 = scmp.ne.s32.totalorder %s54, %s68
      %p70 = scmp.eq.s32.totalorder %s23, 0
      %p71 = por %p69, %p70
      %s73 = sadd.s32 %s72, 1
      %p76 = scmp.eq.s32.totalorder %s17, 1
      %p77 = scmp.ne.s32.totalorder %s72, %s74
      %p78 = scmp.eq.s32.totalorder %s17, 0
      %p79 = por %p77, %p78
      %p80 = scmp.ne.s32.totalorder %s72, %s74
      %p81 = scmp.eq.s32.totalorder %s22, 1
      %p82 = por %p80, %p81
      %p83 = scmp.ne.s32.totalorder %s74, %s75
      %p84 = scmp.eq.s32.totalorder %s22, 0
      %p85 = por %p83, %p84
      %p86 = scmp.ne.s32.totalorder %s74, %s75
      %p87 = scmp.eq.s32.totalorder %s23, 1
      %p88 = por %p86, %p87
      %p90 = scmp.ne.s32.totalorder %s75, %s89
      %p91 = scmp.eq.s32.totalorder %s23, 0
      %p92 = por %p90, %p91
      %s94 = sadd.s32 %s93, 1
      %p97 = scmp.eq.s32.totalorder %s17, 1
      %p98 = scmp.ne.s32.totalorder %s93, %s95
      %p99 = scmp.eq.s32.totalorder %s17, 0
      %p100 = por %p98, %p99
      %p101 = scmp.ne.s32.totalorder %s93, %s95
      %p102 = scmp.eq.s32.totalorder %s22, 1
      %p103 = por %p101, %p102
      %p104 = scmp.ne.s32.totalorder %s95, %s96
      %p105 = scmp.eq.s32.totalorder %s22, 0
      %p106 = por %p104, %p105
      %p107 = scmp.ne.s32.totalorder %s95, %s96
      %p108 = scmp.eq.s32.totalorder %s23, 1
      %p109 = por %p107, %p108
      %p111 = scmp.ne.s32.totalorder %s96, %s110
      %p112 = scmp.eq.s32.totalorder %s23, 0
      %p113 = por %p111, %p112
      %s115 = sadd.s32 %s114, 1
      %p118 = scmp.eq.s32.totalorder %s17, 1
      %p119 = scmp.ne.s32.totalorder %s114, %s116
      %p120 = scmp.eq.s32.totalorder %s17, 0
      %p121 = por %p119, %p120
      %p122 = scmp.ne.s32.totalorder %s114, %s116
      %p123 = scmp.eq.s32.totalorder %s22, 1
      %p124 = por %p122, %p123
      %p125 = scmp.ne.s32.totalorder %s116, %s117
      %p126 = scmp.eq.s32.totalorder %s22, 0
      %p127 = por %p125, %p126
      %p128 = scmp.ne.s32.totalorder %s116, %s117
      %p129 = scmp.eq.s32.totalorder %s23, 1
      %p130 = por %p128, %p129
      %p132 = scmp.ne.s32.totalorder %s117, %s131
      %p133 = scmp.eq.s32.totalorder %s23, 0
      %p134 = por %p132, %p133
      %s135 = ssub.s32 %s17, %s24
      %p136 = scmp.eq.s32.totalorder %s135, 0
      %s138 = sadd.s32 %s137, 1
      %s139 = scalar_select %p136, %s137, %s138
      %p142 = pneg %p136
      %p143 = scmp.eq.s32.totalorder %s17, 1
      %p144 = por %p142, %p143
      %p145 = scmp.ne.s32.totalorder %s137, %s140
      %p146 = scmp.eq.s32.totalorder %s17, 0
      %p147 = por %p145, %p146
      %p148 = scmp.ne.s32.totalorder %s137, %s140
      %p149 = scmp.eq.s32.totalorder %s22, 1
      %p150 = por %p148, %p149
      %p151 = scmp.ne.s32.totalorder %s140, %s141
      %p152 = scmp.eq.s32.totalorder %s22, 0
      %p153 = por %p151, %p152
      %p154 = scmp.ne.s32.totalorder %s140, %s141
      %p155 = scmp.eq.s32.totalorder %s23, 1
      %p156 = por %p154, %p155
      %p158 = scmp.ne.s32.totalorder %s141, %s157
      %p159 = scmp.eq.s32.totalorder %s23, 0
      %p160 = por %p158, %p159
      %p161 = scmp.le.s32.totalorder 1, %s17
      %p162 = scmp.lt.s32.totalorder %s17, 3
      %p163 = pnand %p161, %p162
      %p164 = pneg %p163
      // Predicated region
      $region9: #{tpu_custom_call.1} parent=5 // pred_check
        _
      $region10: #{tpu_custom_call.1} parent=5 // pred_check_branch
        %166 = sbr.rel (%p163) target = $region12
      $region11: #{tpu_custom_call.1} parent=5 // pred_region
        %s167 = ssub.s32 %s17, 1
        // Predicated region
        $region13: #{tpu_custom_call.1} parent=11 // pred_check
          %p168 = pneg %p64
        $region14: #{tpu_custom_call.1} parent=11 // pred_check_branch
          %170 = sbr.rel (%p168) target = $region16
        $region15: #{tpu_custom_call.1} parent=11 // pred_region
          _
        $region16: #{tpu_custom_call.1} parent=11 // pred_fallthru
          _
        // Predicated region
        $region17: #{tpu_custom_call.1} parent=11 // pred_check
          %p171 = pneg %p85
        $region18: #{tpu_custom_call.1} parent=11 // pred_check_branch
          %173 = sbr.rel (%p171) target = $region20
        $region19: #{tpu_custom_call.1} parent=11 // pred_region
          _
        $region20: #{tpu_custom_call.1} parent=11 // pred_fallthru
          _
        // Predicated region
        $region21: #{tpu_custom_call.1} parent=11 // pred_check
          %p174 = pneg %p106
        $region22: #{tpu_custom_call.1} parent=11 // pred_check_branch
          %176 = sbr.rel (%p174) target = $region24
        $region23: #{tpu_custom_call.1} parent=11 // pred_region
          _
        $region24: #{tpu_custom_call.1} parent=11 // pred_fallthru
          _
        // Predicated region
        $region25: #{tpu_custom_call.1} parent=11 // pred_check
          %p177 = pneg %p127
        $region26: #{tpu_custom_call.1} parent=11 // pred_check_branch
          %179 = sbr.rel (%p177) target = $region28
        $region27: #{tpu_custom_call.1} parent=11 // pred_region
          _
        $region28: #{tpu_custom_call.1} parent=11 // pred_fallthru
          _
      $region12: #{tpu_custom_call.1} parent=5 // pred_fallthru
        _
      %p180 = scmp.lt.s32.totalorder %s17, 2
      // Predicated region
      $region29: #{tpu_custom_call.1} parent=5 // pred_check
        %p181 = pneg %p180
      $region30: #{tpu_custom_call.1} parent=5 // pred_check_branch
        %183 = sbr.rel (%p181) target = $region32
      $region31: #{tpu_custom_call.1} parent=5 // pred_region
        // Predicated region
        $region33: #{tpu_custom_call.1} parent=31 // pred_check
          %p184 = pneg %p37
        $region34: #{tpu_custom_call.1} parent=31 // pred_check_branch
          %186 = sbr.rel (%p184) target = $region36
        $region35: #{tpu_custom_call.1} parent=31 // pred_region
          %s187 = sand.u32 %s27, 1
          %s188 = scalar_lea.sflag [#allocation3], %s187
          %s189 = sand.u32 %s27, 1
          %s190 = smul.addr %s189, 256
          %s191 = scalar_lea.vmem [#allocation2], %s190
          %s192 = smul.u32 8, %s17
          %s194 = ssub.s32 4096, 4096
          %195 = vsyncadd %s188, %s194
          %s196 = smul.addr %s192, 4
          %s197 = smul.addr %s196, 128
          %s198 = scalar_lea.hbm %s0, %s197
          %s199 = sshll.u32 %s191, 4
          %s200 = int_to_ptr.vmem [resolvable:$true] %s199
          %205 = dma.hbm_to_vmem [thread:$0]  %s198, 4096, %s200, %s188, 256, 256, 16
        $region36: #{tpu_custom_call.1} parent=31 // pred_fallthru
          _
      $region32: #{tpu_custom_call.1} parent=5 // pred_fallthru
        _
      %p206 = scmp.le.s32.totalorder 1, %s17
      %p207 = scmp.lt.s32.totalorder %s17, 3
      %p208 = pnand %p206, %p207
      %p209 = pneg %p208
      // Predicated region
      $region37: #{tpu_custom_call.1} parent=5 // pred_check
        _
      $region38: #{tpu_custom_call.1} parent=5 // pred_check_branch
        %211 = sbr.rel (%p208) target = $region40
      $region39: #{tpu_custom_call.1} parent=5 // pred_region
        %s212 = ssub.s32 %s17, 1
        %s213 = sand.u32 %s30, 1
        %s214 = scalar_lea.sflag [#allocation3], %s213
        %s215 = sand.u32 %s30, 1
        %s216 = smul.addr %s215, 256
        %s217 = scalar_lea.vmem [#allocation2], %s216
        // Predicated region
        $region41: #{tpu_custom_call.1} parent=39 // pred_check
          %p218 = pneg %p43
        $region42: #{tpu_custom_call.1} parent=39 // pred_check_branch
          %220 = sbr.rel (%p218) target = $region44
        $region43: #{tpu_custom_call.1} parent=39 // pred_region
          %221 = dma.done %s214, 4096
        $region44: #{tpu_custom_call.1} parent=39 // pred_fallthru
          _
        %s222 = sand.u32 %s30, 1
        %s223 = scalar_lea.sflag [#allocation3], %s222
        %s224 = sand.u32 %s30, 1
        %s225 = smul.addr %s224, 256
        %s226 = scalar_lea.vmem [#allocation2], %s225
        %p227 = pneg %p43
        %p228 = pneg %p40
        %p229 = pneg %p64
        %p230 = pneg %p61
        %p231 = pneg %p85
        %p232 = pneg %p82
        %p233 = pneg %p106
        %p234 = pneg %p103
        %p235 = pneg %p127
        %p236 = pneg %p124
        %p237 = pneg %p153
        %p238 = pneg %p150
        %s239 = sand.u32 %s140, 1
        %s240 = scalar_lea.sflag [#allocation4], %s239
        %s241 = sand.u32 %s140, 1
        %s242 = smul.addr %s241, 8
        %s243 = scalar_lea.vmem [#allocation5], %s242
        %s244 = smul.u32 8, %s22
        %v245 = vld [vmem:[%s217] sm:$0xff]
        %v246 = vld [vmem:[%s217 + $0x8] sm:$0xff]
        %v247 = vld [vmem:[%s217 + $0x10] sm:$0xff]
        %v248 = vld [vmem:[%s217 + $0x18] sm:$0xff]
        %v249 = vld [vmem:[%s217 + $0x20] sm:$0xff]
        %v250 = vld [vmem:[%s217 + $0x28] sm:$0xff]
        %v251 = vld [vmem:[%s217 + $0x30] sm:$0xff]
        %v252 = vld [vmem:[%s217 + $0x38] sm:$0xff]
        %v253 = vld [vmem:[%s217 + $0x40] sm:$0xff]
        %v254 = vld [vmem:[%s217 + $0x48] sm:$0xff]
        %v255 = vld [vmem:[%s217 + $0x50] sm:$0xff]
        %v256 = vld [vmem:[%s217 + $0x58] sm:$0xff]
        %v257 = vld [vmem:[%s217 + $0x60] sm:$0xff]
        %v258 = vld [vmem:[%s217 + $0x68] sm:$0xff]
        %v259 = vld [vmem:[%s217 + $0x70] sm:$0xff]
        %v260 = vld [vmem:[%s217 + $0x78] sm:$0xff]
        %v261 = vld [vmem:[%s217 + $0x80] sm:$0xff]
        %v262 = vld [vmem:[%s217 + $0x88] sm:$0xff]
        %v263 = vld [vmem:[%s217 + $0x90] sm:$0xff]
        %v264 = vld [vmem:[%s217 + $0x98] sm:$0xff]
        %v265 = vld [vmem:[%s217 + $0xa0] sm:$0xff]
        %v266 = vld [vmem:[%s217 + $0xa8] sm:$0xff]
        %v267 = vld [vmem:[%s217 + $0xb0] sm:$0xff]
        %v268 = vld [vmem:[%s217 + $0xb8] sm:$0xff]
        %v269 = vld [vmem:[%s217 + $0xc0] sm:$0xff]
        %v270 = vld [vmem:[%s217 + $0xc8] sm:$0xff]
        %v271 = vld [vmem:[%s217 + $0xd0] sm:$0xff]
        %v272 = vld [vmem:[%s217 + $0xd8] sm:$0xff]
        %v273 = vld [vmem:[%s217 + $0xe0] sm:$0xff]
        %v274 = vld [vmem:[%s217 + $0xe8] sm:$0xff]
        %v275 = vld [vmem:[%s217 + $0xf0] sm:$0xff]
        %v276 = vld [vmem:[%s217 + $0xf8] sm:$0xff]
        %v277 = vmax.f32 %v245, %v246
        %278 = vmax.xlane.f32.xlu0 %v277
        %v279 = vpop.xlane.xlu0 %278
        %v280 = vmax.f32 %v247, %v248
        %281 = vmax.xlane.f32.xlu0 %v280
        %v282 = vpop.xlane.xlu0 %281
        %v283 = vmax.f32 %v249, %v250
        %284 = vmax.xlane.f32.xlu0 %v283
        %v285 = vpop.xlane.xlu0 %284
        %v286 = vmax.f32 %v251, %v252
        %287 = vmax.xlane.f32.xlu0 %v286
        %v288 = vpop.xlane.xlu0 %287
        %v289 = vmax.f32 %v253, %v254
        %290 = vmax.xlane.f32.xlu0 %v289
        %v291 = vpop.xlane.xlu0 %290
        %v292 = vmax.f32 %v255, %v256
        %293 = vmax.xlane.f32.xlu0 %v292
        %v294 = vpop.xlane.xlu0 %293
        %v295 = vmax.f32 %v257, %v258
        %296 = vmax.xlane.f32.xlu0 %v295
        %v297 = vpop.xlane.xlu0 %296
        %v298 = vmax.f32 %v259, %v260
        %299 = vmax.xlane.f32.xlu0 %v298
        %v300 = vpop.xlane.xlu0 %299
        %v301 = vmax.f32 %v261, %v262
        %302 = vmax.xlane.f32.xlu0 %v301
        %v303 = vpop.xlane.xlu0 %302
        %v304 = vmax.f32 %v263, %v264
        %305 = vmax.xlane.f32.xlu0 %v304
        %v306 = vpop.xlane.xlu0 %305
        %v307 = vmax.f32 %v265, %v266
        %308 = vmax.xlane.f32.xlu0 %v307
        %v309 = vpop.xlane.xlu0 %308
        %v310 = vmax.f32 %v267, %v268
        %311 = vmax.xlane.f32.xlu0 %v310
        %v312 = vpop.xlane.xlu0 %311
        %v313 = vmax.f32 %v269, %v270
        %314 = vmax.xlane.f32.xlu0 %v313
        %v315 = vpop.xlane.xlu0 %314
        %v316 = vmax.f32 %v271, %v272
        %317 = vmax.xlane.f32.xlu0 %v316
        %v318 = vpop.xlane.xlu0 %317
        %v319 = vmax.f32 %v273, %v274
        %320 = vmax.xlane.f32.xlu0 %v319
        %v321 = vpop.xlane.xlu0 %320
        %v322 = vmax.f32 %v275, %v276
        %323 = vmax.xlane.f32.xlu0 %v322
        %v324 = vpop.xlane.xlu0 %323
        %v325 = vadd.f32 %v245, %v246
        %326 = vadd.xlane.f32.xlu0 %v325
        %v327 = vpop.xlane.xlu0 %326
        %v328 = vadd.f32 %v247, %v248
        %329 = vadd.xlane.f32.xlu0 %v328
        %v330 = vpop.xlane.xlu0 %329
        %v331 = vadd.f32 %v249, %v250
        %332 = vadd.xlane.f32.xlu0 %v331
        %v333 = vpop.xlane.xlu0 %332
        %v334 = vadd.f32 %v251, %v252
        %335 = vadd.xlane.f32.xlu0 %v334
        %v336 = vpop.xlane.xlu0 %335
        %v337 = vadd.f32 %v253, %v254
        %338 = vadd.xlane.f32.xlu0 %v337
        %v339 = vpop.xlane.xlu0 %338
        %v340 = vadd.f32 %v255, %v256
        %341 = vadd.xlane.f32.xlu0 %v340
        %v342 = vpop.xlane.xlu0 %341
        %v343 = vadd.f32 %v257, %v258
        %344 = vadd.xlane.f32.xlu0 %v343
        %v345 = vpop.xlane.xlu0 %344
        %v346 = vadd.f32 %v259, %v260
        %347 = vadd.xlane.f32.xlu0 %v346
        %v348 = vpop.xlane.xlu0 %347
        %v349 = vadd.f32 %v261, %v262
        %350 = vadd.xlane.f32.xlu0 %v349
        %v351 = vpop.xlane.xlu0 %350
        %v352 = vadd.f32 %v263, %v264
        %353 = vadd.xlane.f32.xlu0 %v352
        %v354 = vpop.xlane.xlu0 %353
        %v355 = vadd.f32 %v265, %v266
        %356 = vadd.xlane.f32.xlu0 %v355
        %v357 = vpop.xlane.xlu0 %356
        %v358 = vadd.f32 %v267, %v268
        %359 = vadd.xlane.f32.xlu0 %v358
        %v360 = vpop.xlane.xlu0 %359
        %v361 = vadd.f32 %v269, %v270
        %362 = vadd.xlane.f32.xlu0 %v361
        %v363 = vpop.xlane.xlu0 %362
        %v364 = vadd.f32 %v271, %v272
        %365 = vadd.xlane.f32.xlu0 %v364
        %v366 = vpop.xlane.xlu0 %365
        %v367 = vadd.f32 %v273, %v274
        %368 = vadd.xlane.f32.xlu0 %v367
        %v369 = vpop.xlane.xlu0 %368
        %v370 = vadd.f32 %v275, %v276
        %371 = vadd.xlane.f32.xlu0 %v370
        %v372 = vpop.xlane.xlu0 %371
        %v373 = vmul.f32 %v327, 0.00390625
        %v374 = vmul.f32 %v330, 0.00390625
        %v375 = vmul.f32 %v333, 0.00390625
        %v376 = vmul.f32 %v336, 0.00390625
        %v377 = vmul.f32 %v339, 0.00390625
        %v378 = vmul.f32 %v342, 0.00390625
        %v379 = vmul.f32 %v345, 0.00390625
        %v380 = vmul.f32 %v348, 0.00390625
        %v381 = vmul.f32 %v351, 0.00390625
        %v382 = vmul.f32 %v354, 0.00390625
        %v383 = vmul.f32 %v357, 0.00390625
        %v384 = vmul.f32 %v360, 0.00390625
        %v385 = vmul.f32 %v363, 0.00390625
        %v386 = vmul.f32 %v366, 0.00390625
        %v387 = vmul.f32 %v369, 0.00390625
        %v388 = vmul.f32 %v372, 0.00390625
        %v389 = vadd.f32 %v279, %v373
        %v390 = vadd.f32 %v282, %v374
        %v391 = vadd.f32 %v285, %v375
        %v392 = vadd.f32 %v288, %v376
        %v393 = vadd.f32 %v291, %v377
        %v394 = vadd.f32 %v294, %v378
        %v395 = vadd.f32 %v297, %v379
        %v396 = vadd.f32 %v300, %v380
        %v397 = vadd.f32 %v303, %v381
        %v398 = vadd.f32 %v306, %v382
        %v399 = vadd.f32 %v309, %v383
        %v400 = vadd.f32 %v312, %v384
        %v401 = vadd.f32 %v315, %v385
        %v402 = vadd.f32 %v318, %v386
        %v403 = vadd.f32 %v321, %v387
        %v404 = vadd.f32 %v324, %v388
        %v405 = vld [vmem:[%s1] sm:$0xff]
        %v406 = vld [vmem:[%s1 + $0x8] sm:$0xff]
        %v407 = vld [vmem:[%s2] sm:$0x1]
        %v409 = vlaneseq
        %v410 = vshrl.u32 %v409, 7
        %v411 = vsub.s32 0, %v410
        %v412 = vrot.slane %v407, %v411
        %v430 = vlaneseq
        %v431 = vand.u32 %v430, 127
        %v432 = vlaneseq
        %v433 = vshrl.u32 %v432, 7
        %v434 = vsub.s32 %v431, %v433
        %v435 = vrot.slane %v389, %v434
        %v436 = vadd.s32 %v431, 4294967288
        %v437 = vlaneseq
        %v438 = vshrl.u32 %v437, 7
        %v439 = vsub.s32 %v436, %v438
        %v440 = vrot.slane %v390, %v439
        %vm441 = vcmask 130112
        %v442 = vsel %vm441, %v440, %v435
        %v443 = vlaneseq
        %v444 = vshrl.u32 %v443, 7
        %v445 = vsub.s32 %v431, %v444
        %v446 = vrot.slane %v391, %v445
        %v447 = vlaneseq
        %v448 = vshrl.u32 %v447, 7
        %v449 = vsub.s32 %v436, %v448
        %v450 = vrot.slane %v392, %v449
        %v451 = vsel %vm441, %v450, %v446
        %v452 = vlaneseq
        %v453 = vshrl.u32 %v452, 7
        %v454 = vsub.s32 %v431, %v453
        %v455 = vrot.slane %v393, %v454
        %v456 = vlaneseq
        %v457 = vshrl.u32 %v456, 7
        %v458 = vsub.s32 %v436, %v457
        %v459 = vrot.slane %v394, %v458
        %v460 = vsel %vm441, %v459, %v455
        %v461 = vlaneseq
        %v462 = vshrl.u32 %v461, 7
        %v463 = vsub.s32 %v431, %v462
        %v464 = vrot.slane %v395, %v463
        %v465 = vlaneseq
        %v466 = vshrl.u32 %v465, 7
        %v467 = vsub.s32 %v436, %v466
        %v468 = vrot.slane %v396, %v467
        %v469 = vsel %vm441, %v468, %v464
        %v470 = vlaneseq
        %v471 = vshrl.u32 %v470, 7
        %v472 = vsub.s32 %v431, %v471
        %v473 = vrot.slane %v397, %v472
        %v474 = vlaneseq
        %v475 = vshrl.u32 %v474, 7
        %v476 = vsub.s32 %v436, %v475
        %v477 = vrot.slane %v398, %v476
        %v478 = vsel %vm441, %v477, %v473
        %v479 = vlaneseq
        %v480 = vshrl.u32 %v479, 7
        %v481 = vsub.s32 %v431, %v480
        %v482 = vrot.slane %v399, %v481
        %v483 = vlaneseq
        %v484 = vshrl.u32 %v483, 7
        %v485 = vsub.s32 %v436, %v484
        %v486 = vrot.slane %v400, %v485
        %v487 = vsel %vm441, %v486, %v482
        %v488 = vlaneseq
        %v489 = vshrl.u32 %v488, 7
        %v490 = vsub.s32 %v431, %v489
        %v491 = vrot.slane %v401, %v490
        %v492 = vlaneseq
        %v493 = vshrl.u32 %v492, 7
        %v494 = vsub.s32 %v436, %v493
        %v495 = vrot.slane %v402, %v494
        %v496 = vsel %vm441, %v495, %v491
        %v497 = vlaneseq
        %v498 = vshrl.u32 %v497, 7
        %v499 = vsub.s32 %v431, %v498
        %v500 = vrot.slane %v403, %v499
        %v501 = vlaneseq
        %v502 = vshrl.u32 %v501, 7
        %v503 = vsub.s32 %v436, %v502
        %v504 = vrot.slane %v404, %v503
        %v505 = vsel %vm441, %v504, %v500
        %vm506 = vcmask 1041409
        %v507 = vsel %vm506, %v451, %v442
        %vm508 = vcmask 1042434
        %v509 = vsel %vm508, %v460, %v507
        %vm510 = vcmask 1043459
        %v511 = vsel %vm510, %v469, %v509
        %vm512 = vcmask 1044484
        %v513 = vsel %vm512, %v478, %v511
        %vm514 = vcmask 1045509
        %v515 = vsel %vm514, %v487, %v513
        %vm516 = vcmask 1046534
        %v517 = vsel %vm516, %v496, %v515
        %vm518 = vcmask 1047559
        %v519 = vsel %vm518, %v505, %v517
        %vm520 = vcmask 130048
        %v521 = vsel %vm520, %v519, 0
        %523 = vmatprep.subr.mxu0 0.0
        %524 = vmatpush1.msra.mxu0 %v405
        %525 = vmatprep.subr.mxu0 0.0
        %526 = vmatpush1.msra.mxu0 %v406
        %527 = vmatprep.subr.mxu0 0.0
        %528 = vmatpush1.msra.mxu0 0.0
        %529 = vmatprep.subr.mxu0 0.0
        %530 = vmatpush1.msra.mxu0 0.0
        %531 = vmatprep.subr.mxu0 0.0
        %532 = vmatpush1.msra.mxu0 0.0
        %533 = vmatprep.subr.mxu0 0.0
        %534 = vmatpush1.msra.mxu0 0.0
        %535 = vmatprep.subr.mxu0 0.0
        %536 = vmatpush1.msra.mxu0 0.0
        %537 = vmatprep.subr.mxu0 0.0
        %538 = vmatpush1.msra.mxu0 0.0
        %539 = vmatprep.subr.mxu0 0.0
        %540 = vmatpush1.msra.mxu0 0.0
        %541 = vmatprep.subr.mxu0 0.0
        %542 = vmatpush1.msra.mxu0 0.0
        %543 = vmatprep.subr.mxu0 0.0
        %544 = vmatpush1.msra.mxu0 0.0
        %545 = vmatprep.subr.mxu0 0.0
        %546 = vmatpush1.msra.mxu0 0.0
        %547 = vmatprep.subr.mxu0 0.0
        %548 = vmatpush1.msra.mxu0 0.0
        %549 = vmatprep.subr.mxu0 0.0
        %550 = vmatpush1.msra.mxu0 0.0
        %551 = vmatprep.subr.mxu0 0.0
        %552 = vmatpush1.msra.mxu0 0.0
        %553 = vmatprep.subr.mxu0 0.0
        %554 = vmatpush1.msra.mxu0 0.0
        %555 = vmatprep.subr.mxu0 0.0
        %556 = vmatpush1.msra.mxu0 0.0
        %557 = vmatprep.subr.mxu0 0.0
        %558 = vmatpush1.msra.mxu0 0.0
        %559 = vmatprep.subr.mxu0 0.0
        %560 = vmatpush1.msra.mxu0 0.0
        %561 = vmatprep.subr.mxu0 0.0
        %562 = vmatpush1.msra.mxu0 0.0
        %563 = vmatprep.subr.mxu0 0.0
        %564 = vmatpush1.msra.mxu0 0.0
        %565 = vmatprep.subr.mxu0 0.0
        %566 = vmatpush1.msra.mxu0 0.0
        %567 = vmatprep.subr.mxu0 0.0
        %568 = vmatpush1.msra.mxu0 0.0
        %569 = vmatprep.subr.mxu0 0.0
        %570 = vmatpush1.msra.mxu0 0.0
        %571 = vmatprep.subr.mxu0 0.0
        %572 = vmatpush1.msra.mxu0 0.0
        %573 = vmatprep.subr.mxu0 0.0
        %574 = vmatpush1.msra.mxu0 0.0
        %575 = vmatprep.subr.mxu0 0.0
        %576 = vmatpush1.msra.mxu0 0.0
        %577 = vmatprep.subr.mxu0 0.0
        %578 = vmatpush1.msra.mxu0 0.0
        %579 = vmatprep.subr.mxu0 0.0
        %580 = vmatpush1.msra.mxu0 0.0
        %581 = vmatprep.subr.mxu0 0.0
        %582 = vmatpush1.msra.mxu0 0.0
        %583 = vmatprep.subr.mxu0 0.0
        %584 = vmatpush1.msra.mxu0 0.0
        %585 = vmatprep.subr.mxu0 0.0
        %586 = vmatpush1.msra.mxu0 0.0
        %587 = vmatprep.mubr.f32.mxu0 0.0
        %588 = vmatmul.mubr.f32.gmra.mrb[0].mxu0 %v521
        %v589 = vpop.f32.mrb[0].mxu0
        %v590 = vadd.f32 %v412, %v589
        %v591 = vpop.f32.mrb[0].mxu0
        %592 = vdwg.mxu0
        %v593 = vmax.f32 %v590, 0.0
        %v594 = vld [vmem:[%s3] sm:$0xf]
        %v595 = vld [vmem:[%s4] sm:$0x1]
        %v597 = vlaneseq
        %v598 = vshrl.u32 %v597, 7
        %v599 = vsub.s32 0, %v598
        %v600 = vrot.slane %v595, %v599
        %vm602 = vcmask 31744
        %v604 = vsel %vm602, %v593, 0
        %vm606 = vcmask 1043456
        %v608 = vsel %vm606, %v594, 0
        %610 = vmatprep.subr.mxu0 0.0
        %611 = vmatpush1.msra.mxu0 %v608
        %612 = vmatprep.subr.mxu0 0.0
        %613 = vmatpush1.msra.mxu0 0.0
        %614 = vmatprep.subr.mxu0 0.0
        %615 = vmatpush1.msra.mxu0 0.0
        %616 = vmatprep.subr.mxu0 0.0
        %617 = vmatpush1.msra.mxu0 0.0
        %618 = vmatprep.subr.mxu0 0.0
        %619 = vmatpush1.msra.mxu0 0.0
        %620 = vmatprep.subr.mxu0 0.0
        %621 = vmatpush1.msra.mxu0 0.0
        %622 = vmatprep.subr.mxu0 0.0
        %623 = vmatpush1.msra.mxu0 0.0
        %624 = vmatprep.subr.mxu0 0.0
        %625 = vmatpush1.msra.mxu0 0.0
        %626 = vmatprep.subr.mxu0 0.0
        %627 = vmatpush1.msra.mxu0 0.0
        %628 = vmatprep.subr.mxu0 0.0
        %629 = vmatpush1.msra.mxu0 0.0
        %630 = vmatprep.subr.mxu0 0.0
        %631 = vmatpush1.msra.mxu0 0.0
        %632 = vmatprep.subr.mxu0 0.0
        %633 = vmatpush1.msra.mxu0 0.0
        %634 = vmatprep.subr.mxu0 0.0
        %635 = vmatpush1.msra.mxu0 0.0
        %636 = vmatprep.subr.mxu0 0.0
        %637 = vmatpush1.msra.mxu0 0.0
        %638 = vmatprep.subr.mxu0 0.0
        %639 = vmatpush1.msra.mxu0 0.0
        %640 = vmatprep.subr.mxu0 0.0
        %641 = vmatpush1.msra.mxu0 0.0
        %642 = vmatprep.subr.mxu0 0.0
        %643 = vmatpush1.msra.mxu0 0.0
        %644 = vmatprep.subr.mxu0 0.0
        %645 = vmatpush1.msra.mxu0 0.0
        %646 = vmatprep.subr.mxu0 0.0
        %647 = vmatpush1.msra.mxu0 0.0
        %648 = vmatprep.subr.mxu0 0.0
        %649 = vmatpush1.msra.mxu0 0.0
        %650 = vmatprep.subr.mxu0 0.0
        %651 = vmatpush1.msra.mxu0 0.0
        %652 = vmatprep.subr.mxu0 0.0
        %653 = vmatpush1.msra.mxu0 0.0
        %654 = vmatprep.subr.mxu0 0.0
        %655 = vmatpush1.msra.mxu0 0.0
        %656 = vmatprep.subr.mxu0 0.0
        %657 = vmatpush1.msra.mxu0 0.0
        %658 = vmatprep.subr.mxu0 0.0
        %659 = vmatpush1.msra.mxu0 0.0
        %660 = vmatprep.subr.mxu0 0.0
        %661 = vmatpush1.msra.mxu0 0.0
        %662 = vmatprep.subr.mxu0 0.0
        %663 = vmatpush1.msra.mxu0 0.0
        %664 = vmatprep.subr.mxu0 0.0
        %665 = vmatpush1.msra.mxu0 0.0
        %666 = vmatprep.subr.mxu0 0.0
        %667 = vmatpush1.msra.mxu0 0.0
        %668 = vmatprep.subr.mxu0 0.0
        %669 = vmatpush1.msra.mxu0 0.0
        %670 = vmatprep.subr.mxu0 0.0
        %671 = vmatpush1.msra.mxu0 0.0
        %672 = vmatprep.subr.mxu0 0.0
        %673 = vmatpush1.msra.mxu0 0.0
        %674 = vmatprep.mubr.f32.mxu0 0.0
        %675 = vmatmul.mubr.f32.gmra.mrb[0].mxu0 %v604
        %v676 = vpop.f32.mrb[0].mxu0
        %v677 = vadd.f32 %v600, %v676
        %v678 = vpop.f32.mrb[0].mxu0
        %679 = vdwg.mxu0
        %v680 = vxor.u32 %v677, 2147483648
        %v681 = vmul.f32 %v680, 1.442695
        %v682 = vpow.pop %v681
        %v683 = vadd.f32 %v682, 1.0
        %v684 = vrcp.pop %v683
        %v685 = vmul.f32 1.0, %v684
        %686 = vst.msk [vmem:[%s243] sm:$0xff] %vm520, %v685
        %s687 = sand.u32 %s140, 1
        %s688 = scalar_lea.sflag [#allocation4], %s687
        %s689 = sand.u32 %s140, 1
        %s690 = smul.addr %s689, 8
        %s691 = scalar_lea.vmem [#allocation5], %s690
        // Predicated region
        $region45: #{tpu_custom_call.1} parent=39 // pred_check
          %p692 = pneg %p150
        $region46: #{tpu_custom_call.1} parent=39 // pred_check_branch
          %694 = sbr.rel (%p692) target = $region48
        $region47: #{tpu_custom_call.1} parent=39 // pred_region
          %s696 = ssub.s32 128, 128
          %697 = vsyncadd %s688, %s696
          %s698 = smul.addr %s22, 128
          %s699 = scalar_lea.hbm %s5, %s698
          %s701 = sshll.u32 %s691, 4
          %s702 = int_to_ptr.vmem [resolvable:$true] %s701
          %704 = dma.vmem_to_hbm [thread:$0]  %s702, 128, %s699, %s688
        $region48: #{tpu_custom_call.1} parent=39 // pred_fallthru
          _
      $region40: #{tpu_custom_call.1} parent=5 // pred_fallthru
        _
      %p705 = scmp.le.s32.totalorder 2, %s17
      // Predicated region
      $region49: #{tpu_custom_call.1} parent=5 // pred_check
        %p706 = pneg %p705
      $region50: #{tpu_custom_call.1} parent=5 // pred_check_branch
        %708 = sbr.rel (%p706) target = $region52
      $region51: #{tpu_custom_call.1} parent=5 // pred_region
        %s709 = ssub.s32 %s17, 2
        // Predicated region
        $region53: #{tpu_custom_call.1} parent=51 // pred_check
          %p710 = pneg %p156
        $region54: #{tpu_custom_call.1} parent=51 // pred_check_branch
          %712 = sbr.rel (%p710) target = $region56
        $region55: #{tpu_custom_call.1} parent=51 // pred_region
          %s713 = sand.u32 %s141, 1
          %s714 = scalar_lea.sflag [#allocation4], %s713
          %s715 = sand.u32 %s141, 1
          %s716 = smul.addr %s715, 8
          %s717 = scalar_lea.vmem [#allocation5], %s716
          %718 = dma.done %s714, 128
        $region56: #{tpu_custom_call.1} parent=51 // pred_fallthru
          _
      $region52: #{tpu_custom_call.1} parent=5 // pred_fallthru
        _
    $region6: #{tpu_custom_call.1} parent=1 // loop_footer
      %s21 = sadd.s32 1, %s17
    $region7: #{tpu_custom_call.1} parent=1 // loop_footer_branch
      %16 = sbr.rel target = $region3
    $region8: #{tpu_custom_call.1} parent=1 // loop_exit
      _
    %719 = vsyncpa [#allocation3], 1
    %s720 = scalar_lea.sflag [#allocation3], 1
    %721 = vsyncpa %s720, 1
    %722 = vsyncpa [#allocation4], 1
    %s723 = scalar_lea.sflag [#allocation4], 1
    %724 = vsyncpa %s723, 1

</llo_original>
